<compile_context>
chip_gen: v7x
topology: tpu7x:2x2x1
jax: 0.10.0
libtpu: 0.0.40
codegen_flags: <defaults>
</compile_context>

<pallas_src>
import functools

import jax
import jax.numpy as jnp
from jax.experimental import pallas as pl
from jax.experimental.pallas import tpu as pltpu

_LANES = 128
_VMEM_LIMIT = 48 * 1024 * 1024   # < 64 MiB (v7x physical), > all default scoped limits


def _round_up(x, m):
    return ((x + m - 1) // m) * m


def _cdiv(a, b):
    return -(-a // b)


def _device_kind():
    try:
        return jax.devices()[0].device_kind.lower()
    except Exception:
        return ""


def _is_v7x():
    return "7" in _device_kind()


def _tile_rows_cap():
    """Rows (of 128 lanes) per grid step for the streaming reduction."""
    kind = _device_kind()
    if "7" in kind:        # v7x: 3.2 TB/s HBM -> ~12 MiB / step
        return 16384
    if "v6" in kind:       # v6e: ~1.3-1.4 TB/s -> ~6 MiB / step
        return 8192
    return 4096            # v5e / unknown -> ~3 MiB / step


def _static_pow(base, gamma):
    """base ** gamma for a *static* Python float gamma.

    Small integer exponents use repeated VPU multiplies (no EUP exp/log and no
    NaN for slightly-negative bases); otherwise falls back to jnp.power.
    """
    g = float(gamma)
    if g == int(g) and 0 <= int(g) <= 16:
        e = int(g)
        if e == 0:
            return jnp.ones_like(base)
        out = None
        cur = base
        while True:
            if e & 1:
                out = cur if out is None else out * cur
            e >>= 1
            if e == 0:
                break
            cur = cur * cur
        return out
    return jnp.power(base, g)


# ----------------------------------------------------------------------------
# 'mean' / 'sum' path: lane-dense streaming reduction with VMEM accumulator.
# ----------------------------------------------------------------------------
def _focal_sum_kernel(pred_ref, label_ref, out_ref, acc_ref, *,
                      gamma, eps, rows, tile_r, bpc, need_mask):
    ci = pl.program_id(0)
    j = pl.program_id(1)

    @pl.when(j == 0)
    def _init():
        acc_ref[...] = jnp.zeros_like(acc_ref)

    p = pred_ref[...] + eps                              # (tile_r, 128) f32, VPU
    fw = _static_pow(1.0 - p, gamma)                     # VPU multiplies for int gamma
    terms = fw * label_ref[...].astype(jnp.float32) * jnp.log(p)   # one EUP log / elem

    if need_mask:
        # Ragged last tile and clamped duplicate tiles: zero rows at or past
        # the logical end of the flattened stream (no wrapper-side padding).
        row_start = (ci * bpc + j) * tile_r              # logical (unclamped) start
        valid = rows - row_start                         # may be <= 0 for dup blocks
        row_ids = jax.lax.broadcasted_iota(jnp.int32, (tile_r, 1), 0)
        terms = jnp.where(row_ids < valid, terms, 0.0)

    acc_ref[...] += jnp.sum(terms, axis=0, keepdims=True)           # (1, 128)

    @pl.when(j == pl.num_programs(1) - 1)
    def _finalize():
        # Lane-dense (1, 1, 128) partial; final scalar reduce in the wrapper.
        out_ref[...] = jnp.reshape(acc_ref[...], out_ref.shape)


def _focal_loss_reduced(pred, label, alpha, gamma, eps, reduction,
                        max_tile_rows=None):
    n, c = pred.shape
    total = n * c

    pred_f = pred.reshape(-1)      # contiguous -> free reshape
    label_f = label.reshape(-1)

    main_len = (total // _LANES) * _LANES
    tail_len = total - main_len

    partial = jnp.float32(0.0)

    if main_len > 0:
        rows = main_len // _LANES
        cap = _tile_rows_cap() if max_tile_rows is None else int(max_tile_rows)
        cap = max(8, (cap // 8) * 8)
        tile_r = rows if rows <= cap else cap            # full-dim or 8-aligned
        blocks = _cdiv(rows, tile_r)
        num_chunks = 2 if blocks >= 2 else 1             # one chunk per TC on 2-TC chips
        bpc = _cdiv(blocks, num_chunks)
        need_mask = (rows % tile_r != 0) or (blocks % num_chunks != 0)

        if tail_len == 0:
            pred2 = pred_f.reshape(rows, _LANES)         # zero-copy view
            label2 = label_f.reshape(rows, _LANES)
        else:
            # TODO(synk): fully in-kernel ragged-lane handling would avoid this
            # slice copy; it only triggers when N*C % 128 != 0.
            pred2 = pred_f[:main_len].reshape(rows, _LANES)
            label2 = label_f[:main_len].reshape(rows, _LANES)

        def in_map(ci, j):
            # Clamp logical block index; clamped duplicates are zero-masked
            # in-kernel via the `need_mask` path above.
            return (jnp.minimum(ci * bpc + j, blocks - 1), 0)

        kernel = functools.partial(
            _focal_sum_kernel, gamma=float(gamma), eps=float(eps),
            rows=rows, tile_r=tile_r, bpc=bpc, need_mask=need_mask)

        in_bytes = main_len * (pred2.dtype.itemsize + label2.dtype.itemsize)
        cost = pl.CostEstimate(flops=6 * main_len,
                               transcendentals=main_len,
                               bytes_accessed=in_bytes + num_chunks * _LANES * 4)

        lead_sem = (pltpu.CORE_PARALLEL
                    if (_is_v7x() and num_chunks >= 2) else pltpu.PARALLEL)

        partials = pl.pallas_call(
            kernel,
            grid=(num_chunks, bpc),
            in_specs=[
                pl.BlockSpec((tile_r, _LANES), in_map),
                pl.BlockSpec((tile_r, _LANES), in_map),
            ],
            out_specs=pl.BlockSpec((1, 1, _LANES), lambda ci, j: (ci, 0, 0)),
            out_shape=jax.ShapeDtypeStruct((num_chunks, 1, _LANES), jnp.float32),
            scratch_shapes=[pltpu.VMEM((1, _LANES), jnp.float32)],
            compiler_params=pltpu.CompilerParams(
                dimension_semantics=(lead_sem, pltpu.ARBITRARY),
                vmem_limit_bytes=_VMEM_LIMIT),
            cost_estimate=cost,
        )(pred2, label2)
        partial = jnp.sum(partials)

    if tail_len > 0:
        # < 128 leftover elements: plain XLA (tiny slice, no full-array pad).
        p_t = pred_f[main_len:] + eps
        tail_terms = (_static_pow(1.0 - p_t, gamma)
                      * label_f[main_len:].astype(jnp.float32) * jnp.log(p_t))
        partial = partial + jnp.sum(tail_terms)

    loss = (-float(alpha)) * partial
    if reduction == "mean":
        loss = loss / jnp.float32(n)
    return loss


# ----------------------------------------------------------------------------
# 'none' path: per-sample losses, tiled over N (no wrapper padding).
# ----------------------------------------------------------------------------
def _focal_none_kernel(pred_ref, label_ref, out_ref, *, alpha, gamma, eps):
    p = pred_ref[...] + eps
    fw = _static_pow(1.0 - p, gamma)
    terms = fw * label_ref[...].astype(jnp.float32) * jnp.log(p)
    # TODO(synk): lane-dense (1, tile_n) store (sublane->lane relayout) would
    # lift the masked vst.msk bottleneck for small C; kept (tile_n, 1) for a
    # guaranteed-clean lowering.
    out_ref[...] = (-float(alpha)) * jnp.sum(terms, axis=1, keepdims=True)


def _focal_loss_none(pred, label, alpha, gamma, eps, max_tile_rows=None):
    n, c = pred.shape
    lane_c = _round_up(c, _LANES)                 # VMEM lane-pads the class dim
    # Double-buffered VMEM bytes per row: 2 bufs x (4 B pred + 2 B label) x lane_c.
    budget = 16 * 1024 * 1024
    per_row = 2 * (4 + 2) * lane_c
    t = max(8, min(4096, (budget // per_row) // 8 * 8))
    if max_tile_rows is not None:
        t = max(8, (int(max_tile_rows) // 8) * 8)
    tile_n = n if n <= t else t                   # full-dim or 8-aligned
    n_blocks = _cdiv(n, tile_n)

    kernel = functools.partial(_focal_none_kernel, alpha=float(alpha),
                               gamma=float(gamma), eps=float(eps))

    cost = pl.CostEstimate(
        flops=6 * n * c, transcendentals=n * c,
        bytes_accessed=n * c * (pred.dtype.itemsize + label.dtype.itemsize) + n * 4)

    out = pl.pallas_call(
        kernel,
        grid=(n_blocks,),
        in_specs=[
            pl.BlockSpec((tile_n, c), lambda i: (i, 0)),
            pl.BlockSpec((tile_n, c), lambda i: (i, 0)),
        ],
        out_specs=pl.BlockSpec((tile_n, 1), lambda i: (i, 0)),
        out_shape=jax.ShapeDtypeStruct((n, 1), jnp.float32),
        compiler_params=pltpu.CompilerParams(
            dimension_semantics=(pltpu.PARALLEL,),
            vmem_limit_bytes=_VMEM_LIMIT),
        cost_estimate=cost,
    )(pred, label)
    return out[:, 0]


# ----------------------------------------------------------------------------
# Public wrapper (mirrors FocalLoss.forward).
# ----------------------------------------------------------------------------
def focal_loss(pred, label_one_hot, *, alpha=0.25, gamma=2.0,
               reduction="mean", eps=1e-12, max_tile_rows=None):
    assert pred.shape == label_one_hot.shape and pred.ndim == 2
    pred = pred.astype(jnp.float32)
    # One-hot {0,1} labels are exact in bf16; halves label HBM traffic.
    label = label_one_hot.astype(jnp.bfloat16)
    if reduction in ("mean", "sum"):
        return _focal_loss_reduced(pred, label, alpha, gamma, eps, reduction,
                                   max_tile_rows=max_tile_rows)
    # torch module falls through to the per-sample loss for any other value.
    return _focal_loss_none(pred, label, alpha, gamma, eps,
                            max_tile_rows=max_tile_rows)


def focal_loss_ref(pred, label_one_hot, *, alpha=0.25, gamma=2.0,
                   reduction="mean", eps=1e-12):
    pred = pred.astype(jnp.float32) + eps
    fw = jnp.power(1.0 - pred, gamma)
    loss = -jnp.sum(alpha * fw * label_one_hot.astype(jnp.float32)
                    * jnp.log(pred), axis=1)
    if reduction == "mean":
        return jnp.mean(loss)
    elif reduction == "sum":
        return jnp.sum(loss)
    return loss


if __name__ == "__main__":
    key = jax.random.PRNGKey(0)

    def make_case(k, n, c):
        k1, k2 = jax.random.split(k)
        logits = jax.random.normal(k1, (n, c), dtype=jnp.float32)
        pred = jax.nn.softmax(logits, axis=1)              # probabilities
        labels = jax.random.randint(k2, (n,), 0, c)
        one_hot = jax.nn.one_hot(labels, c, dtype=jnp.bfloat16)   # exact 0/1
        return pred, one_hot

    # (name, N, C, max_tile_rows override to exercise the multi-block paths)
    cases = [
        ("aligned",      8, 32, None),   # N*C = 256: lane-aligned, single block
        ("ragged_lanes", 10, 24, None),  # N*C = 240: 128 via kernel + XLA tail
        ("multi_block",  44, 64, 8),     # small tiles: clamp + in-kernel row mask
    ]

    k = key
    for name, n, c, cap in cases:
        k, sub = jax.random.split(k)
        pred, one_hot = make_case(sub, n, c)
        for red in ("mean", "sum", "none"):
            fn = jax.jit(functools.partial(focal_loss, alpha=0.25, gamma=2.0,
                                           reduction=red, max_tile_rows=cap))
            out = jax.block_until_ready(fn(pred, one_hot))
            ref = focal_loss_ref(pred, one_hot, alpha=0.25, gamma=2.0,
                                 reduction=red)
            assert jnp.allclose(out, ref, rtol=1e-5, atol=1e-6), (
                name, red, out, ref)

    print("KERNEL_OK")
</pallas_src>

<mosaic_0001>
module attributes {stable_mosaic.version = 11 : i64} {
  func.func @_focal_sum_kernel(%arg0: i32, %arg1: i32, %arg2: memref<2x128xf32, #tpu.memory_space<vmem>>, %arg3: memref<2x128xbf16, #tpu.memory_space<vmem>>, %arg4: memref<1x1x128xf32, #tpu.memory_space<vmem>>, %arg5: memref<1x128xf32, #tpu.memory_space<vmem>>) attributes {dimension_semantics = [#tpu.dimension_semantics<parallel>, #tpu.dimension_semantics<arbitrary>], iteration_bounds = array<i64: 1, 1>, scalar_prefetch = 0 : i64, scratch_operands = 1 : i64, tpu.core_type = #tpu.core_type<tc>, window_params = [{transform_indices = @transform_0, window_bounds = array<i64: 2, 128>}, {transform_indices = @transform_1, window_bounds = array<i64: 2, 128>}, {transform_indices = @transform_2, window_bounds = array<i64: 1, 1, 128>}]} {
    %c0_i32 = arith.constant 0 : i32
    %0 = arith.cmpi eq, %arg1, %c0_i32 : i32
    %1 = arith.extui %0 : i1 to i32
    %c0_i32_0 = arith.constant 0 : i32
    %2 = arith.cmpi ne, %1, %c0_i32_0 : i32
    scf.if %2 {
      %cst_12 = arith.constant 0.000000e+00 : f32
      %22 = vector.broadcast %cst_12 : f32 to vector<1x128xf32>
      %c0_13 = arith.constant 0 : index
      %c0_14 = arith.constant 0 : index
      %23 = vector.load %arg5[%c0_13, %c0_14] : memref<1x128xf32, #tpu.memory_space<vmem>>, vector<1x128xf32>
      tpu.vector_store %arg5[%c0_13, %c0_14], %22 {strides = array<i32>} : memref<1x128xf32, #tpu.memory_space<vmem>>, vector<1x128xf32>,
    } else {
    }
    %c0 = arith.constant 0 : index
    %c0_1 = arith.constant 0 : index
    %3 = vector.load %arg2[%c0, %c0_1] : memref<2x128xf32, #tpu.memory_space<vmem>>, vector<2x128xf32>
    %cst = arith.constant 9.99999996E-13 : f32
    %4 = vector.broadcast %cst : f32 to vector<2x128xf32>
    %5 = arith.addf %3, %4 : vector<2x128xf32>
    %cst_2 = arith.constant 1.000000e+00 : f32
    %6 = vector.broadcast %cst_2 : f32 to vector<2x128xf32>
    %7 = arith.subf %6, %5 : vector<2x128xf32>
    %8 = arith.mulf %7, %7 : vector<2x128xf32>
    %c0_3 = arith.constant 0 : index
    %c0_4 = arith.constant 0 : index
    %9 = vector.load %arg3[%c0_3, %c0_4] : memref<2x128xbf16, #tpu.memory_space<vmem>>, vector<2x128xbf16>
    %10 = arith.extf %9 : vector<2x128xbf16> to vector<2x128xf32>
    %11 = arith.mulf %8, %10 : vector<2x128xf32>
    %12 = math.log %5 : vector<2x128xf32>
    %13 = arith.mulf %11, %12 : vector<2x128xf32>
    %c0_5 = arith.constant 0 : index
    %c0_6 = arith.constant 0 : index
    %14 = vector.load %arg5[%c0_5, %c0_6] : memref<1x128xf32, #tpu.memory_space<vmem>>, vector<1x128xf32>
    %cst_7 = arith.constant dense<0.000000e+00> : vector<128xf32>
    %15 = vector.multi_reduction <add>, %13, %cst_7 [0] : vector<2x128xf32> to vector<128xf32>
    %16 = vector.shape_cast %15 : vector<128xf32> to vector<1x128xf32>
    %17 = arith.addf %14, %16 : vector<1x128xf32>
    %c0_8 = arith.constant 0 : index
    %c0_9 = arith.constant 0 : index
    %18 = vector.load %arg5[%c0_8, %c0_9] : memref<1x128xf32, #tpu.memory_space<vmem>>, vector<1x128xf32>
    tpu.vector_store %arg5[%c0_8, %c0_9], %17 {strides = array<i32>} : memref<1x128xf32, #tpu.memory_space<vmem>>, vector<1x128xf32>,
    %c0_i32_10 = arith.constant 0 : i32
    %19 = arith.cmpi eq, %arg1, %c0_i32_10 : i32
    %20 = arith.extui %19 : i1 to i32
    %c0_i32_11 = arith.constant 0 : i32
    %21 = arith.cmpi ne, %20, %c0_i32_11 : i32
    scf.if %21 {
      %c0_12 = arith.constant 0 : index
      %c0_13 = arith.constant 0 : index
      %22 = vector.load %arg5[%c0_12, %c0_13] : memref<1x128xf32, #tpu.memory_space<vmem>>, vector<1x128xf32>
      %23 = vector.shape_cast %22 : vector<1x128xf32> to vector<1x1x128xf32>
      %c0_14 = arith.constant 0 : index
      %c0_15 = arith.constant 0 : index
      %c0_16 = arith.constant 0 : index
      %24 = vector.load %arg4[%c0_14, %c0_15, %c0_16] : memref<1x1x128xf32, #tpu.memory_space<vmem>>, vector<1x1x128xf32>
      tpu.vector_store %arg4[%c0_14, %c0_15, %c0_16], %23 {strides = array<i32>} : memref<1x1x128xf32, #tpu.memory_space<vmem>>, vector<1x1x128xf32>,
    } else {
    }
    return
  }
  func.func @transform_0(%arg0: i32, %arg1: i32) -> (i32, i32) {
    %c1_i32 = arith.constant 1 : i32
    %0 = arith.muli %arg0, %c1_i32 : i32
    %1 = arith.addi %0, %arg1 : i32
    %c0_i32 = arith.constant 0 : i32
    %2 = arith.minsi %1, %c0_i32 : i32
    %c0_i32_0 = arith.constant 0 : i32
    %c0_i32_1 = arith.constant 0 : i32
    return %2, %c0_i32_0 : i32, i32
  }
  func.func @transform_1(%arg0: i32, %arg1: i32) -> (i32, i32) {
    %c1_i32 = arith.constant 1 : i32
    %0 = arith.muli %arg0, %c1_i32 : i32
    %1 = arith.addi %0, %arg1 : i32
    %c0_i32 = arith.constant 0 : i32
    %2 = arith.minsi %1, %c0_i32 : i32
    %c0_i32_0 = arith.constant 0 : i32
    %c0_i32_1 = arith.constant 0 : i32
    return %2, %c0_i32_0 : i32, i32
  }
  func.func @transform_2(%arg0: i32, %arg1: i32) -> (i32, i32, i32) {
    %c0_i32 = arith.constant 0 : i32
    %c0_i32_0 = arith.constant 0 : i32
    %c0_i32_1 = arith.constant 0 : i32
    return %arg0, %c0_i32, %c0_i32_0 : i32, i32, i32
  }
}

</mosaic_0001>

<llo_original>
// kernel: focal_loss.1
$region0: #{focal_loss.1}
  #allocation0 [shape = 'u32[]', space=smem, size = 0x4, offset = 0x4, fixed_abs, tag = 'smem constant byte address 0x4 - core index']
  #allocation1 [shape = 'u32[144,128]{1,0:T(1,128)}', space=vmem, size = 0x12000, scoped, tag = 'internal scratch']
  #allocation2 [shape = 'f32[1,128]{1,0:T(1,128)}', space=vmem, size = 0x200, scoped, tag = 'scratch operand']
  %s0 = inlined_call_operand.vmem [shape: f32[2,128], index: 0, kind: input, shape index: {}]
  %s1 = inlined_call_operand.vmem [shape: bf16[2,128], index: 1, kind: input, shape index: {}]
  %s2 = inlined_call_operand.vmem [shape: f32[1,1,128], index: 2, kind: output, shape index: {}]
  %s3 = sld [smem:[#allocation0]]
  $region26: #{focal_loss.1} parent=0
    _
  %s5 = ssub.s32 1, %s3
  %s6 = scalar_select 0, %s5, %s3
  // Predicated region
  $region2: #{focal_loss.1} parent=0 // pred_check
    _
  $region3: #{focal_loss.1} parent=0 // pred_check_branch
    %8 = sbr.rel (0) target = $region5
  $region4: #{focal_loss.1} parent=0 // pred_region
    %s9 = sadd.s32 0, 0
    %p10 = scmp.lt.s32.totalorder %s9, 0
    %s11 = scalar_select %p10, %s9, 0
    %p12 = scmp.lt.s32.totalorder %s11, 0
    %s13 = scalar_select %p12, %s11, 0
    %s14 = smul.addr %s13, 2
    %s15 = scalar_lea.vmem %s0, %s14
    %s16 = sadd.s32 0, 0
    %p17 = scmp.lt.s32.totalorder %s16, 0
    %s18 = scalar_select %p17, %s16, 0
  $region5: #{focal_loss.1} parent=0 // pred_fallthru
    _
  // Predicated region
  $region6: #{focal_loss.1} parent=0 // pred_check
    _
  $region7: #{focal_loss.1} parent=0 // pred_check_branch
    %20 = sbr.rel (0) target = $region9
  $region8: #{focal_loss.1} parent=0 // pred_region
    %s21 = sadd.s32 0, 0
    %p22 = scmp.lt.s32.totalorder %s21, 0
    %s23 = scalar_select %p22, %s21, 0
    %p24 = scmp.lt.s32.totalorder %s23, 0
    %s25 = scalar_select %p24, %s23, 0
    %s26 = scalar_lea.vmem %s1, %s25
    %s27 = sadd.s32 0, 0
    %p28 = scmp.lt.s32.totalorder %s27, 0
    %s29 = scalar_select %p28, %s27, 0
  $region9: #{focal_loss.1} parent=0 // pred_fallthru
    _
  %s30 = sadd.s32 0, 0
  %p31 = scmp.lt.s32.totalorder %s30, 0
  %s32 = scalar_select %p31, %s30, 0
  %p33 = scmp.lt.s32.totalorder %s32, 0
  %s34 = scalar_select %p33, %s32, 0
  %s35 = smul.addr %s34, 2
  %s36 = scalar_lea.vmem %s0, %s35
  %s37 = sadd.s32 0, 0
  %p38 = scmp.lt.s32.totalorder %s37, 0
  %s39 = scalar_select %p38, %s37, 0
  %p40 = scmp.lt.s32.totalorder %s39, 0
  %s41 = scalar_select %p40, %s39, 0
  %s42 = scalar_lea.vmem %s1, %s41
  %s43 = sadd.s32 0, 0
  %p44 = scmp.lt.s32.totalorder %s43, 0
  %s45 = scalar_select %p44, %s43, 0
  %p46 = scmp.lt.s32.totalorder %s45, 0
  %s47 = scalar_select %p46, %s45, 0
  %s48 = smul.addr %s47, 2
  %s49 = scalar_lea.vmem %s0, %s48
  %s50 = sadd.s32 0, 0
  %p51 = scmp.lt.s32.totalorder %s50, 0
  %s52 = scalar_select %p51, %s50, 0
  %s53 = sadd.s32 0, 0
  %p54 = scmp.lt.s32.totalorder %s53, 0
  %s55 = scalar_select %p54, %s53, 0
  %p56 = scmp.lt.s32.totalorder %s55, 0
  %s57 = scalar_select %p56, %s55, 0
  %s58 = scalar_lea.vmem %s1, %s57
  %s59 = sadd.s32 0, 0
  %p60 = scmp.lt.s32.totalorder %s59, 0
  %s61 = scalar_select %p60, %s59, 0
  %p62 = scmp.eq.s32.totalorder 0, 0
  // Predicated region
  $region10: #{focal_loss.1} parent=0 // pred_check
    %p63 = pneg %p62
  $region11: #{focal_loss.1} parent=0 // pred_check_branch
    %65 = sbr.rel (%p63) target = $region13
  $region12: #{focal_loss.1} parent=0 // pred_region
    %66 = vst [vmem:[#allocation2] sm:$0x1] 0.0
  $region13: #{focal_loss.1} parent=0 // pred_fallthru
    _
  %v67 = vld [vmem:[%s49] sm:$0x3]
  %v68 = vadd.f32 %v67, 1e-12
  %v69 = vsub.f32 1.0, %v68
  %v70 = vmul.f32 %v69, %v69
  %v71 = vld [vmem:[%s58] sm:$0x1]
  %v72 = vunpack.c.l.bf16 %v71
  %v73 = vmul.f32 %v70, %v72
  %v74 = vlog2.pop %v68
  %v75 = vmul.f32 %v74, 0.6931472
  %v76 = vmul.f32 %v73, %v75
  %v77 = vld [vmem:[#allocation2] sm:$0x1]
  %vm78 = vcmask 1041408
  %v79 = vsel %vm78, %v76, 0.0
  %v80 = vrot.slane %v79, 4
  %v81 = vadd.f32 %v79, %v80
  %v82 = vrot.slane %v81, 2
  %v83 = vadd.f32 %v81, %v82
  %v84 = vrot.slane %v83, 1
  %v85 = vadd.f32 %v83, %v84
  %v86 = vadd.f32 %v77, %v85
  %87 = vst [vmem:[#allocation2] sm:$0x1] %v86
  // Predicated region
  $region14: #{focal_loss.1} parent=0 // pred_check
    %p88 = pneg %p62
  $region15: #{focal_loss.1} parent=0 // pred_check_branch
    %90 = sbr.rel (%p88) target = $region17
  $region16: #{focal_loss.1} parent=0 // pred_region
    %v91 = vld [vmem:[#allocation2] sm:$0x1]
    %92 = vst [vmem:[%s2] sm:$0x1] %v91
  $region17: #{focal_loss.1} parent=0 // pred_fallthru
    _
  // Predicated region
  $region18: #{focal_loss.1} parent=0 // pred_check
    _
  $region19: #{focal_loss.1} parent=0 // pred_check_branch
    %94 = sbr.rel (0) target = $region21
  $region20: #{focal_loss.1} parent=0 // pred_region
    _
  $region21: #{focal_loss.1} parent=0 // pred_fallthru
    _
  // Predicated region
  $region22: #{focal_loss.1} parent=0 // pred_check
    _
  $region23: #{focal_loss.1} parent=0 // pred_check_branch
    %96 = sbr.rel (0) target = $region25
  $region24: #{focal_loss.1} parent=0 // pred_region
    _
  $region25: #{focal_loss.1} parent=0 // pred_fallthru
    _

</llo_original>
